<compile_context>
chip_gen: v7x
topology: tpu7x:2x2x1
jax: 0.10.0
libtpu: 0.0.40
codegen_flags: <defaults>
</compile_context>

<pallas_src>
import functools

import jax
import jax.numpy as jnp
from jax.experimental import pallas as pl
from jax.experimental.pallas import tpu as pltpu


def _round_up(x, m):
    return ((x + m - 1) // m) * m


def _pick_tile_m(n_dst, requested):
    """Largest tile that divides n_dst, is <= requested, and is 8-aligned
    (or falls back to the full dimension)."""
    t = min(requested, n_dst)
    if n_dst % t == 0 and (t % 8 == 0 or t == n_dst):
        return t
    for cand in (512, 256, 128, 64, 32, 16, 8):
        if cand <= t and n_dst % cand == 0:
            return cand
    return n_dst


def _pick_tile_k(n_src, requested):
    """K tile must be a multiple of 128 dividing n_src, or the full n_src."""
    if n_src % 128 != 0:
        return n_src
    t = min(requested, n_src)
    t = max(128, (t // 128) * 128)
    while n_src % t != 0:
        t -= 128
    return t


def _sage_conv_kernel(a_ref, hsrc_ref, hself_ref, w_ref, b_ref, *rest,
                      apply_relu, apply_dropout, fuse, in_feats):
    if apply_dropout:
        mask_ref, out_ref, acc_ref = rest
    else:
        out_ref, acc_ref = rest

    k = pl.program_id(1)

    @pl.when(k == 0)
    def _init():
        acc_ref[...] = jnp.zeros_like(acc_ref)

    # Partial mean aggregation: (tile_m, tile_k) @ (tile_k, in_feats), f32 acc.
    acc_ref[...] += jnp.dot(a_ref[...], hsrc_ref[...],
                            preferred_element_type=jnp.float32)

    @pl.when(k == pl.num_programs(1) - 1)
    def _finalize():
        neigh = acc_ref[...].astype(hself_ref.dtype)
        if fuse:
            # Single fused matmul with K = 2*in_feats.
            feats = jnp.concatenate([hself_ref[...], neigh], axis=1)
            h = jnp.dot(feats, w_ref[...], preferred_element_type=jnp.float32)
        else:
            h = (jnp.dot(hself_ref[...], w_ref[:in_feats, :],
                         preferred_element_type=jnp.float32)
                 + jnp.dot(neigh, w_ref[in_feats:, :],
                           preferred_element_type=jnp.float32))
        h = h + b_ref[...]
        if apply_relu:
            h = jnp.maximum(h, 0.0)
        if apply_dropout:
            # mask already holds 0 or 1/(1-p): one multiply in the epilogue.
            h = h * mask_ref[...]
        out_ref[...] = h.astype(out_ref.dtype)


def sage_conv(a_norm, h_src, w_self, w_neigh, bias, *, apply_relu,
              dropout_key=None, dropout_p=0.5, tile_m=128, tile_k=512,
              compute_dtype=jnp.bfloat16):
    """One SAGEConv('mean') layer as a Pallas TPU kernel.

    a_norm : (n_dst, n_src) row-normalized mean-aggregation matrix
    h_src  : (n_src, in_feats) src node features (dst nodes = first n_dst rows)
    """
    n_dst, n_src = a_norm.shape
    in_feats = h_src.shape[1]
    out_feats = w_self.shape[1]
    assert n_dst <= n_src, "dst nodes must be a prefix of the src node set"

    # Lane-dense output: pad out_feats to a multiple of 128 (free on the MXU,
    # avoids masked partial stores); padding is sliced off on return.
    out_p = _round_up(out_feats, 128)
    if out_p != out_feats:
        pad = out_p - out_feats
        w_self = jnp.pad(w_self, ((0, 0), (0, pad)))
        w_neigh = jnp.pad(w_neigh, ((0, 0), (0, pad)))
        bias = jnp.pad(bias, (0, pad))

    tile_m = _pick_tile_m(n_dst, tile_m)
    tile_k = _pick_tile_k(n_src, tile_k)
    grid = (n_dst // tile_m, n_src // tile_k)

    # bf16 MXU operands (halves DMA bytes); accumulation stays f32 in-kernel.
    a_c = a_norm.astype(compute_dtype)
    h_c = h_src.astype(compute_dtype)   # passed twice: K-slabs + dst-row tiles
    w_cat = jnp.concatenate([w_self, w_neigh], axis=0).astype(compute_dtype)
    bias2d = bias.reshape(1, out_p).astype(jnp.float32)

    apply_dropout = dropout_key is not None
    fuse = (in_feats % 128 == 0)

    kernel = functools.partial(
        _sage_conv_kernel,
        apply_relu=apply_relu,
        apply_dropout=apply_dropout,
        fuse=fuse,
        in_feats=in_feats,
    )

    in_specs = [
        pl.BlockSpec((tile_m, tile_k), lambda i, k: (i, k)),       # A tile
        pl.BlockSpec((tile_k, in_feats), lambda i, k: (k, 0)),     # h_src K-slab
        pl.BlockSpec((tile_m, in_feats), lambda i, k: (i, 0)),     # self rows (aliases h_src)
        pl.BlockSpec((2 * in_feats, out_p), lambda i, k: (0, 0)),  # fused [W_self; W_neigh]
        pl.BlockSpec((1, out_p), lambda i, k: (0, 0)),             # bias
    ]
    inputs = [a_c, h_c, h_c, w_cat, bias2d]

    if apply_dropout:
        keep = jax.random.bernoulli(dropout_key, 1.0 - dropout_p, (n_dst, out_p))
        mask = keep.astype(jnp.float32) * (1.0 / (1.0 - dropout_p))
        in_specs.append(pl.BlockSpec((tile_m, out_p), lambda i, k: (i, 0)))
        inputs.append(mask)

    grid_spec = pltpu.PrefetchScalarGridSpec(
        num_scalar_prefetch=0,
        grid=grid,
        in_specs=in_specs,
        out_specs=pl.BlockSpec((tile_m, out_p), lambda i, k: (i, 0)),
        scratch_shapes=[pltpu.VMEM((tile_m, in_feats), jnp.float32)],
    )

    out = pl.pallas_call(
        kernel,
        grid_spec=grid_spec,
        out_shape=jax.ShapeDtypeStruct((n_dst, out_p), jnp.float32),
        compiler_params=pltpu.CompilerParams(
            dimension_semantics=("parallel", "arbitrary")),
    )(*inputs)

    if out_p != out_feats:
        out = out[:, :out_feats]
    return out


def sage_forward(params, blocks, x, key, *, training=True, dropout_p=0.5,
                 tile_m=128, tile_k=512):
    """SAGE.forward: h = x; for each (layer, block): h = SAGEConv(block, h);
    ReLU + Dropout between layers."""
    h = x
    n_layers = len(params)
    for l, (a_norm, p) in enumerate(zip(blocks, params)):
        is_last = (l == n_layers - 1)
        dk = None
        if training and not is_last:
            key, dk = jax.random.split(key)
        h = sage_conv(
            a_norm, h, p["w_self"], p["w_neigh"], p["bias"],
            apply_relu=not is_last,
            dropout_key=dk,
            dropout_p=dropout_p,
            tile_m=tile_m,
            tile_k=tile_k,
        )
    return h


def _make_block(key, n_dst, n_src, p_edge=0.15):
    """Dense row-normalized mean-aggregation matrix for a sampled block."""
    adj = jax.random.bernoulli(key, p_edge, (n_dst, n_src)).astype(jnp.float32)
    deg = jnp.clip(adj.sum(axis=1, keepdims=True), 1.0)   # DGL: clamp(min=1)
    return adj / deg


def _linear_init(key, fan_in, fan_out):
    scale = 1.0 / jnp.sqrt(jnp.float32(fan_in))
    return jax.random.uniform(key, (fan_in, fan_out), jnp.float32,
                              -scale, scale)


if __name__ == "__main__":
    # Small, deterministic synthetic problem (lane-aligned feature widths).
    in_feats, n_hidden, n_classes = 128, 128, 32
    n_src1, n_dst1, n_dst2 = 256, 128, 64      # block2 src = block1 dst

    key = jax.random.PRNGKey(0)
    kx, kb1, kb2, k1, k2, k3, k4, kdrop = jax.random.split(key, 8)

    x = jax.random.normal(kx, (n_src1, in_feats), jnp.float32)
    blocks = [
        _make_block(kb1, n_dst1, n_src1),
        _make_block(kb2, n_dst2, n_dst1),
    ]

    params = [
        {
            "w_self": _linear_init(k1, in_feats, n_hidden),
            "w_neigh": _linear_init(k2, in_feats, n_hidden),
            "bias": jnp.zeros((n_hidden,), jnp.float32),
        },
        {
            "w_self": _linear_init(k3, n_hidden, n_classes),
            "w_neigh": _linear_init(k4, n_hidden, n_classes),
            "bias": jnp.zeros((n_classes,), jnp.float32),
        },
    ]

    # tile_k=128 exercises the multi-step K-accumulation path on layer 1.
    out = sage_forward(params, blocks, x, kdrop, training=True,
                       tile_m=128, tile_k=128)
    jax.block_until_ready(out)
    assert out.shape == (n_dst2, n_classes)
    print("KERNEL_OK")
</pallas_src>

<mosaic_0001>
module attributes {stable_mosaic.version = 11 : i64} {
  func.func @_sage_conv_kernel(%arg0: i32, %arg1: i32, %arg2: memref<128x128xbf16, #tpu.memory_space<vmem>>, %arg3: memref<128x128xbf16, #tpu.memory_space<vmem>>, %arg4: memref<128x128xbf16, #tpu.memory_space<vmem>>, %arg5: memref<256x128xbf16, #tpu.memory_space<vmem>>, %arg6: memref<1x128xf32, #tpu.memory_space<vmem>>, %arg7: memref<128x128xf32, #tpu.memory_space<vmem>>, %arg8: memref<128x128xf32, #tpu.memory_space<vmem>>, %arg9: memref<128x128xf32, #tpu.memory_space<vmem>>) attributes {dimension_semantics = [#tpu.dimension_semantics<parallel>, #tpu.dimension_semantics<arbitrary>], iteration_bounds = array<i64: 1, 2>, scalar_prefetch = 0 : i64, scratch_operands = 1 : i64, tpu.core_type = #tpu.core_type<tc>, window_params = [{transform_indices = @transform_0, window_bounds = array<i64: 128, 128>}, {transform_indices = @transform_1, window_bounds = array<i64: 128, 128>}, {transform_indices = @transform_2, window_bounds = array<i64: 128, 128>}, {pipeline_mode = #tpu.pipeline_mode<synchronous>, transform_indices = @transform_3, window_bounds = array<i64: 256, 128>}, {pipeline_mode = #tpu.pipeline_mode<synchronous>, transform_indices = @transform_4, window_bounds = array<i64: 1, 128>}, {transform_indices = @transform_5, window_bounds = array<i64: 128, 128>}, {transform_indices = @transform_6, window_bounds = array<i64: 128, 128>}]} {
    %c0_i32 = arith.constant 0 : i32
    %0 = arith.cmpi eq, %arg1, %c0_i32 : i32
    %1 = arith.extui %0 : i1 to i32
    %c0_i32_0 = arith.constant 0 : i32
    %2 = arith.cmpi ne, %1, %c0_i32_0 : i32
    scf.if %2 {
      %cst_9 = arith.constant 0.000000e+00 : f32
      %12 = vector.broadcast %cst_9 : f32 to vector<128x128xf32>
      %c0_10 = arith.constant 0 : index
      %c0_11 = arith.constant 0 : index
      %13 = vector.load %arg9[%c0_10, %c0_11] : memref<128x128xf32, #tpu.memory_space<vmem>>, vector<128x128xf32>
      tpu.vector_store %arg9[%c0_10, %c0_11], %12 {strides = array<i32>} : memref<128x128xf32, #tpu.memory_space<vmem>>, vector<128x128xf32>,
    } else {
    }
    %c0 = arith.constant 0 : index
    %c0_1 = arith.constant 0 : index
    %3 = vector.load %arg9[%c0, %c0_1] : memref<128x128xf32, #tpu.memory_space<vmem>>, vector<128x128xf32>
    %c0_2 = arith.constant 0 : index
    %c0_3 = arith.constant 0 : index
    %4 = vector.load %arg2[%c0_2, %c0_3] : memref<128x128xbf16, #tpu.memory_space<vmem>>, vector<128x128xbf16>
    %c0_4 = arith.constant 0 : index
    %c0_5 = arith.constant 0 : index
    %5 = vector.load %arg3[%c0_4, %c0_5] : memref<128x128xbf16, #tpu.memory_space<vmem>>, vector<128x128xbf16>
    %cst = arith.constant dense<0.000000e+00> : vector<128x128xf32>
    %6 = tpu.matmul %4, %5, %cst {dimension_numbers = #tpu.dot_dimension_numbers<[1], [0], [0], [1], [0, 0, 1, 1], [], []>} : vector<128x128xbf16>, vector<128x128xbf16>, vector<128x128xf32> -> vector<128x128xf32>
    %7 = arith.addf %3, %6 : vector<128x128xf32>
    %c0_6 = arith.constant 0 : index
    %c0_7 = arith.constant 0 : index
    %8 = vector.load %arg9[%c0_6, %c0_7] : memref<128x128xf32, #tpu.memory_space<vmem>>, vector<128x128xf32>
    tpu.vector_store %arg9[%c0_6, %c0_7], %7 {strides = array<i32>} : memref<128x128xf32, #tpu.memory_space<vmem>>, vector<128x128xf32>,
    %c1_i32 = arith.constant 1 : i32
    %9 = arith.cmpi eq, %arg1, %c1_i32 : i32
    %10 = arith.extui %9 : i1 to i32
    %c0_i32_8 = arith.constant 0 : i32
    %11 = arith.cmpi ne, %10, %c0_i32_8 : i32
    scf.if %11 {
      %c0_9 = arith.constant 0 : index
      %c0_10 = arith.constant 0 : index
      %12 = vector.load %arg9[%c0_9, %c0_10] : memref<128x128xf32, #tpu.memory_space<vmem>>, vector<128x128xf32>
      %13 = arith.truncf %12 : vector<128x128xf32> to vector<128x128xbf16>
      %c0_11 = arith.constant 0 : index
      %c0_12 = arith.constant 0 : index
      %14 = vector.load %arg4[%c0_11, %c0_12] : memref<128x128xbf16, #tpu.memory_space<vmem>>, vector<128x128xbf16>
      %15 = tpu.concatenate %14, %13 in 1 : vector<128x128xbf16>, vector<128x128xbf16> -> vector<128x256xbf16>
      %c0_13 = arith.constant 0 : index
      %c0_14 = arith.constant 0 : index
      %16 = vector.load %arg5[%c0_13, %c0_14] : memref<256x128xbf16, #tpu.memory_space<vmem>>, vector<256x128xbf16>
      %cst_15 = arith.constant dense<0.000000e+00> : vector<128x128xf32>
      %17 = tpu.matmul %15, %16, %cst_15 {dimension_numbers = #tpu.dot_dimension_numbers<[1], [0], [0], [1], [0, 0, 1, 1], [], []>} : vector<128x256xbf16>, vector<256x128xbf16>, vector<128x128xf32> -> vector<128x128xf32>
      %c0_16 = arith.constant 0 : index
      %c0_17 = arith.constant 0 : index
      %18 = vector.load %arg6[%c0_16, %c0_17] : memref<1x128xf32, #tpu.memory_space<vmem>>, vector<1x128xf32>
      %19 = vector.broadcast %18 : vector<1x128xf32> to vector<128x128xf32>
      %20 = arith.addf %17, %19 : vector<128x128xf32>
      %cst_18 = arith.constant 0.000000e+00 : f32
      %21 = vector.broadcast %cst_18 : f32 to vector<128x128xf32>
      %22 = arith.maximumf %20, %21 : vector<128x128xf32>
      %c0_19 = arith.constant 0 : index
      %c0_20 = arith.constant 0 : index
      %23 = vector.load %arg7[%c0_19, %c0_20] : memref<128x128xf32, #tpu.memory_space<vmem>>, vector<128x128xf32>
      %24 = arith.mulf %22, %23 : vector<128x128xf32>
      %c0_21 = arith.constant 0 : index
      %c0_22 = arith.constant 0 : index
      %25 = vector.load %arg8[%c0_21, %c0_22] : memref<128x128xf32, #tpu.memory_space<vmem>>, vector<128x128xf32>
      tpu.vector_store %arg8[%c0_21, %c0_22], %24 {strides = array<i32>} : memref<128x128xf32, #tpu.memory_space<vmem>>, vector<128x128xf32>,
    } else {
    }
    return
  }
  func.func @transform_0(%arg0: i32, %arg1: i32) -> (i32, i32) {
    %c0_i32 = arith.constant 0 : i32
    return %arg0, %arg1 : i32, i32
  }
  func.func @transform_1(%arg0: i32, %arg1: i32) -> (i32, i32) {
    %c0_i32 = arith.constant 0 : i32
    %c0_i32_0 = arith.constant 0 : i32
    return %arg1, %c0_i32 : i32, i32
  }
  func.func @transform_2(%arg0: i32, %arg1: i32) -> (i32, i32) {
    %c0_i32 = arith.constant 0 : i32
    %c0_i32_0 = arith.constant 0 : i32
    return %arg0, %c0_i32 : i32, i32
  }
  func.func @transform_3(%arg0: i32, %arg1: i32) -> (i32, i32) {
    %c0_i32 = arith.constant 0 : i32
    %c0_i32_0 = arith.constant 0 : i32
    %c0_i32_1 = arith.constant 0 : i32
    return %c0_i32, %c0_i32_0 : i32, i32
  }
  func.func @transform_4(%arg0: i32, %arg1: i32) -> (i32, i32) {
    %c0_i32 = arith.constant 0 : i32
    %c0_i32_0 = arith.constant 0 : i32
    %c0_i32_1 = arith.constant 0 : i32
    return %c0_i32, %c0_i32_0 : i32, i32
  }
  func.func @transform_5(%arg0: i32, %arg1: i32) -> (i32, i32) {
    %c0_i32 = arith.constant 0 : i32
    %c0_i32_0 = arith.constant 0 : i32
    return %arg0, %c0_i32 : i32, i32
  }
  func.func @transform_6(%arg0: i32, %arg1: i32) -> (i32, i32) {
    %c0_i32 = arith.constant 0 : i32
    %c0_i32_0 = arith.constant 0 : i32
    return %arg0, %c0_i32 : i32, i32
  }
}

</mosaic_0001>

<llo_original>
// kernel: tpu_custom_call.1
$region0: #{tpu_custom_call.1}
  #allocation0 [shape = 'u32[]', space=smem, size = 0x4, offset = 0x4, fixed_abs, tag = 'smem constant byte address 0x4 - core index']
  #allocation1 [shape = 'u32[144,128]{1,0:T(1,128)}', space=vmem, size = 0x12000, scoped, tag = 'internal scratch']
  #allocation2 [shape = 'f32[128,128]{1,0:T(8,128)}', space=vmem, size = 0x10000, scoped, tag = 'scratch operand']
  %s0 = inlined_call_operand.hbm [shape: bf16[128,256], index: 0, kind: input, shape index: {}]
  %s1 = inlined_call_operand.hbm [shape: bf16[256,128], index: 1, kind: input, shape index: {}]
  %s2 = inlined_call_operand.hbm [shape: bf16[256,128], index: 2, kind: input, shape index: {}]
  %s3 = inlined_call_operand.hbm [shape: bf16[256,128], index: 3, kind: input, shape index: {}]
  %s4 = inlined_call_operand.vmem [shape: f32[1,128], index: 4, kind: input, shape index: {}]
  %s5 = inlined_call_operand.hbm [shape: f32[128,128], index: 5, kind: input, shape index: {}]
  %s6 = inlined_call_operand.hbm [shape: f32[128,128], index: 6, kind: output, shape index: {}]
  %s7 = sld [smem:[#allocation0]]
  $region85: #{tpu_custom_call.1} parent=0
    _
  %s9 = ssub.s32 1, %s7
  %s10 = scalar_select 0, %s9, %s7
  $region1: #{tpu_custom_call.1} parent=0
    #allocation3 [shape = 'u8[65536]{0}', space=vmem, size = 0x10000, scoped, tag = 'input window, operand 0']
    #allocation4 [shape = 's32[2]{0}', space=sflag, size = 0x8, scoped, tag = 'scoped memory for tpu_custom_call.1']
    #allocation5 [shape = 's32[2]{0}', space=sflag, size = 0x8, scoped, tag = 'scoped memory for tpu_custom_call.1']
    #allocation6 [shape = 'u8[65536]{0}', space=vmem, size = 0x10000, scoped, tag = 'input window, operand 1']
    #allocation7 [shape = 's32[2]{0}', space=sflag, size = 0x8, scoped, tag = 'scoped memory for tpu_custom_call.1']
    #allocation8 [shape = 'u8[32768]{0}', space=vmem, size = 0x8000, scoped, tag = 'input window, operand 2, single buffered']
    #allocation9 [shape = 'u8[65536]{0}', space=vmem, size = 0x10000, scoped, tag = 'input window, operand 3, single buffered']
    #allocation10 [shape = 's32[1]{0}', space=sflag, size = 0x4, scoped, tag = 'scoped memory for tpu_custom_call.1']
    #allocation11 [shape = 'u8[65536]{0}', space=vmem, size = 0x10000, scoped, tag = 'input window, operand 5, single buffered']
    #allocation12 [shape = 'u8[65536]{0}', space=vmem, size = 0x10000, scoped, tag = 'output window, operand 0, single buffered']
    %11 = vsyncpa [#allocation4], 0
    %s12 = scalar_lea.sflag [#allocation4], 1
    %13 = vsyncpa %s12, 0
    %14 = vsyncpa [#allocation7], 0
    %s15 = scalar_lea.sflag [#allocation7], 1
    %16 = vsyncpa %s15, 0
    %17 = vsyncpa [#allocation10], 0
    %18 = vsyncpa [#allocation5], 0
    loop: start=0, step=1, limit=4
    $region2: #{tpu_custom_call.1} parent=1 // loop_pre_header
      _
    $region3: #{tpu_custom_call.1} parent=1 // loop_header
      %s20 = sphi 0, %s24
      %p21 = scmp.ge.s32.totalorder %s20, 4
      %s27 = sphi 0, %s39
      %s28 = sphi 0, %s35
      %s29 = sphi 0, %s27
      %s30 = sphi 0, %s28
      %s31 = sphi 0, %s29
      %s32 = sphi 0, %s30
      %s44 = sphi 0, %s46
      %s47 = sphi 0, %s44
      %s48 = sphi 0, %s47
      %s64 = sphi 0, %s48
      %s70 = sphi 0, %s72
      %s73 = sphi 0, %s70
      %s74 = sphi 0, %s73
      %s90 = sphi 0, %s74
      %s96 = sphi 0, %s98
      %s99 = sphi 0, %s96
      %s100 = sphi 0, %s99
      %s116 = sphi 0, %s100
      %s120 = sphi 0, %s120
      %s122 = sphi 0, %s120
      %s123 = sphi 0, %s122
      %s137 = sphi 0, %s123
      %s141 = sphi 0, %s141
      %s143 = sphi 0, %s141
      %s144 = sphi 0, %s143
      %s158 = sphi 0, %s144
      %s164 = sphi 0, %s166
      %s167 = sphi 0, %s164
      %s168 = sphi 0, %s167
      %s184 = sphi 0, %s168
      %s190 = sphi 0, %s192
      %s193 = sphi 0, %s190
      %s194 = sphi 0, %s193
      %s210 = sphi 0, %s194
    $region4: #{tpu_custom_call.1} parent=1 // loop_header_branch
      %23 = sbr.rel (%p21) target = $region8
    $region5: #{tpu_custom_call.1} parent=1 // loop_body
      %s25 = ssub.s32 %s20, 1
      %s26 = ssub.s32 %s20, 2
      %s33 = sadd.s32 1, %s28
      %p34 = scmp.ge.s32.totalorder %s33, 2
      %s35 = scalar_select %p34, 0, %s33
      %s36 = sadd.s32 1, %s27
      %s37 = scalar_select %p34, %s36, %s27
      %p38 = scmp.ge.s32.totalorder %s37, 1
      %s39 = scalar_select %p38, 0, %s37
      %s40 = ssub.s32 %s27, %s39
      %s41 = ssub.s32 %s28, %s35
      %s42 = sor.u32 %s40, %s41
      %p43 = scmp.eq.s32.totalorder %s42, 0
      %s45 = sadd.s32 %s44, 1
      %s46 = scalar_select %p43, %s44, %s45
      %p49 = pneg %p43
      %p50 = scmp.eq.s32.totalorder %s20, 1
      %p51 = por %p49, %p50
      %p52 = scmp.ne.s32.totalorder %s44, %s47
      %p53 = scmp.eq.s32.totalorder %s20, 0
      %p54 = por %p52, %p53
      %p55 = scmp.ne.s32.totalorder %s44, %s47
      %p56 = scmp.eq.s32.totalorder %s25, 1
      %p57 = por %p55, %p56
      %p58 = scmp.ne.s32.totalorder %s47, %s48
      %p59 = scmp.eq.s32.totalorder %s25, 0
      %p60 = por %p58, %p59
      %p61 = scmp.ne.s32.totalorder %s47, %s48
      %p62 = scmp.eq.s32.totalorder %s26, 1
      %p63 = por %p61, %p62
      %p65 = scmp.ne.s32.totalorder %s48, %s64
      %p66 = scmp.eq.s32.totalorder %s26, 0
      %p67 = por %p65, %p66
      %s68 = ssub.s32 %s28, %s35
      %p69 = scmp.eq.s32.totalorder %s68, 0
      %s71 = sadd.s32 %s70, 1
      %s72 = scalar_select %p69, %s70, %s71
      %p75 = pneg %p69
      %p76 = scmp.eq.s32.totalorder %s20, 1
      %p77 = por %p75, %p76
      %p78 = scmp.ne.s32.totalorder %s70, %s73
      %p79 = scmp.eq.s32.totalorder %s20, 0
      %p80 = por %p78, %p79
      %p81 = scmp.ne.s32.totalorder %s70, %s73
      %p82 = scmp.eq.s32.totalorder %s25, 1
      %p83 = por %p81, %p82
      %p84 = scmp.ne.s32.totalorder %s73, %s74
      %p85 = scmp.eq.s32.totalorder %s25, 0
      %p86 = por %p84, %p85
      %p87 = scmp.ne.s32.totalorder %s73, %s74
      %p88 = scmp.eq.s32.totalorder %s26, 1
      %p89 = por %p87, %p88
      %p91 = scmp.ne.s32.totalorder %s74, %s90
      %p92 = scmp.eq.s32.totalorder %s26, 0
      %p93 = por %p91, %p92
      %s94 = ssub.s32 %s27, %s39
      %p95 = scmp.eq.s32.totalorder %s94, 0
      %s97 = sadd.s32 %s96, 1
      %s98 = scalar_select %p95, %s96, %s97
      %p101 = pneg %p95
      %p102 = scmp.eq.s32.totalorder %s20, 1
      %p103 = por %p101, %p102
      %p104 = scmp.ne.s32.totalorder %s96, %s99
      %p105 = scmp.eq.s32.totalorder %s20, 0
      %p106 = por %p104, %p105
      %p107 = scmp.ne.s32.totalorder %s96, %s99
      %p108 = scmp.eq.s32.totalorder %s25, 1
      %p109 = por %p107, %p108
      %p110 = scmp.ne.s32.totalorder %s99, %s100
      %p111 = scmp.eq.s32.totalorder %s25, 0
      %p112 = por %p110, %p111
      %p113 = scmp.ne.s32.totalorder %s99, %s100
      %p114 = scmp.eq.s32.totalorder %s26, 1
      %p115 = por %p113, %p114
      %p117 = scmp.ne.s32.totalorder %s100, %s116
      %p118 = scmp.eq.s32.totalorder %s26, 0
      %p119 = por %p117, %p118
      %s121 = sadd.s32 %s120, 1
      %p124 = scmp.eq.s32.totalorder %s20, 1
      %p125 = scmp.ne.s32.totalorder %s120, %s122
      %p126 = scmp.eq.s32.totalorder %s20, 0
      %p127 = por %p125, %p126
      %p128 = scmp.ne.s32.totalorder %s120, %s122
      %p129 = scmp.eq.s32.totalorder %s25, 1
      %p130 = por %p128, %p129
      %p131 = scmp.ne.s32.totalorder %s122, %s123
      %p132 = scmp.eq.s32.totalorder %s25, 0
      %p133 = por %p131, %p132
      %p134 = scmp.ne.s32.totalorder %s122, %s123
      %p135 = scmp.eq.s32.totalorder %s26, 1
      %p136 = por %p134, %p135
      %p138 = scmp.ne.s32.totalorder %s123, %s137
      %p139 = scmp.eq.s32.totalorder %s26, 0
      %p140 = por %p138, %p139
      %s142 = sadd.s32 %s141, 1
      %p145 = scmp.eq.s32.totalorder %s20, 1
      %p146 = scmp.ne.s32.totalorder %s141, %s143
      %p147 = scmp.eq.s32.totalorder %s20, 0
      %p148 = por %p146, %p147
      %p149 = scmp.ne.s32.totalorder %s141, %s143
      %p150 = scmp.eq.s32.totalorder %s25, 1
      %p151 = por %p149, %p150
      %p152 = scmp.ne.s32.totalorder %s143, %s144
      %p153 = scmp.eq.s32.totalorder %s25, 0
      %p154 = por %p152, %p153
      %p155 = scmp.ne.s32.totalorder %s143, %s144
      %p156 = scmp.eq.s32.totalorder %s26, 1
      %p157 = por %p155, %p156
      %p159 = scmp.ne.s32.totalorder %s144, %s158
      %p160 = scmp.eq.s32.totalorder %s26, 0
      %p161 = por %p159, %p160
      %s162 = ssub.s32 %s27, %s39
      %p163 = scmp.eq.s32.totalorder %s162, 0
      %s165 = sadd.s32 %s164, 1
      %s166 = scalar_select %p163, %s164, %s165
      %p169 = pneg %p163
      %p170 = scmp.eq.s32.totalorder %s20, 1
      %p171 = por %p169, %p170
      %p172 = scmp.ne.s32.totalorder %s164, %s167
      %p173 = scmp.eq.s32.totalorder %s20, 0
      %p174 = por %p172, %p173
      %p175 = scmp.ne.s32.totalorder %s164, %s167
      %p176 = scmp.eq.s32.totalorder %s25, 1
      %p177 = por %p175, %p176
      %p178 = scmp.ne.s32.totalorder %s167, %s168
      %p179 = scmp.eq.s32.totalorder %s25, 0
      %p180 = por %p178, %p179
      %p181 = scmp.ne.s32.totalorder %s167, %s168
      %p182 = scmp.eq.s32.totalorder %s26, 1
      %p183 = por %p181, %p182
      %p185 = scmp.ne.s32.totalorder %s168, %s184
      %p186 = scmp.eq.s32.totalorder %s26, 0
      %p187 = por %p185, %p186
      %s188 = ssub.s32 %s27, %s39
      %p189 = scmp.eq.s32.totalorder %s188, 0
      %s191 = sadd.s32 %s190, 1
      %s192 = scalar_select %p189, %s190, %s191
      %p195 = pneg %p189
      %p196 = scmp.eq.s32.totalorder %s20, 1
      %p197 = por %p195, %p196
      %p198 = scmp.ne.s32.totalorder %s190, %s193
      %p199 = scmp.eq.s32.totalorder %s20, 0
      %p200 = por %p198, %p199
      %p201 = scmp.ne.s32.totalorder %s190, %s193
      %p202 = scmp.eq.s32.totalorder %s25, 1
      %p203 = por %p201, %p202
      %p204 = scmp.ne.s32.totalorder %s193, %s194
      %p205 = scmp.eq.s32.totalorder %s25, 0
      %p206 = por %p204, %p205
      %p207 = scmp.ne.s32.totalorder %s193, %s194
      %p208 = scmp.eq.s32.totalorder %s26, 1
      %p209 = por %p207, %p208
      %p211 = scmp.ne.s32.totalorder %s194, %s210
      %p212 = scmp.eq.s32.totalorder %s26, 0
      %p213 = por %p211, %p212
      %p214 = scmp.le.s32.totalorder 1, %s20
      %p215 = scmp.lt.s32.totalorder %s20, 3
      %p216 = pnand %p214, %p215
      %p217 = pneg %p216
      // Predicated region
      $region9: #{tpu_custom_call.1} parent=5 // pred_check
        _
      $region10: #{tpu_custom_call.1} parent=5 // pred_check_branch
        %219 = sbr.rel (%p216) target = $region12
      $region11: #{tpu_custom_call.1} parent=5 // pred_region
        %s220 = ssub.s32 %s20, 1
        // Predicated region
        $region13: #{tpu_custom_call.1} parent=11 // pred_check
          %p221 = pneg %p112
        $region14: #{tpu_custom_call.1} parent=11 // pred_check_branch
          %223 = sbr.rel (%p221) target = $region16
        $region15: #{tpu_custom_call.1} parent=11 // pred_region
          %s224 = smul.u32 16, %s29
          %s226 = ssub.s32 1024, 1024
          %227 = vsyncadd [#allocation7], %s226
          %s228 = smul.addr %s224, 64
          %s229 = scalar_lea.hbm %s2, %s228
          %s230 = sshll.u32 [#allocation8], 4
          %s231 = int_to_ptr.vmem [resolvable:$true] %s230
          %236 = dma.hbm_to_vmem [thread:$0]  %s229, 1024, %s231, [#allocation7], 64, 64, 4
        $region16: #{tpu_custom_call.1} parent=11 // pred_fallthru
          _
        // Predicated region
        $region17: #{tpu_custom_call.1} parent=11 // pred_check
          %p237 = pneg %p133
        $region18: #{tpu_custom_call.1} parent=11 // pred_check_branch
          %239 = sbr.rel (%p237) target = $region20
        $region19: #{tpu_custom_call.1} parent=11 // pred_region
          %s241 = ssub.s32 2048, 2048
          %242 = vsyncadd [#allocation10], %s241
          %s243 = sshll.u32 [#allocation9], 4
          %s244 = int_to_ptr.vmem [resolvable:$true] %s243
          %249 = dma.hbm_to_vmem [thread:$0]  %s3, 2048, %s244, [#allocation10], 64, 64, 4
        $region20: #{tpu_custom_call.1} parent=11 // pred_fallthru
          _
        // Predicated region
        $region21: #{tpu_custom_call.1} parent=11 // pred_check
          %p250 = pneg %p154
        $region22: #{tpu_custom_call.1} parent=11 // pred_check_branch
          %252 = sbr.rel (%p250) target = $region24
        $region23: #{tpu_custom_call.1} parent=11 // pred_region
          _
        $region24: #{tpu_custom_call.1} parent=11 // pred_fallthru
          _
        // Predicated region
        $region25: #{tpu_custom_call.1} parent=11 // pred_check
          %p253 = pneg %p180
        $region26: #{tpu_custom_call.1} parent=11 // pred_check_branch
          %255 = sbr.rel (%p253) target = $region28
        $region27: #{tpu_custom_call.1} parent=11 // pred_region
          %s256 = smul.u32 16, %s29
          %s258 = ssub.s32 2048, 2048
          %259 = vsyncadd [#allocation10], %s258
          %s260 = smul.addr %s256, 128
          %s261 = scalar_lea.hbm %s5, %s260
          %s262 = sshll.u32 [#allocation11], 4
          %s263 = int_to_ptr.vmem [resolvable:$true] %s262
          %268 = dma.hbm_to_vmem [thread:$0]  %s261, 2048, %s263, [#allocation10], 128, 128, 8
        $region28: #{tpu_custom_call.1} parent=11 // pred_fallthru
          _
      $region12: #{tpu_custom_call.1} parent=5 // pred_fallthru
        _
      %p269 = scmp.lt.s32.totalorder %s20, 2
      // Predicated region
      $region29: #{tpu_custom_call.1} parent=5 // pred_check
        %p270 = pneg %p269
      $region30: #{tpu_custom_call.1} parent=5 // pred_check_branch
        %272 = sbr.rel (%p270) target = $region32
      $region31: #{tpu_custom_call.1} parent=5 // pred_region
        // Predicated region
        $region33: #{tpu_custom_call.1} parent=31 // pred_check
          %p273 = pneg %p54
        $region34: #{tpu_custom_call.1} parent=31 // pred_check_branch
          %275 = sbr.rel (%p273) target = $region36
        $region35: #{tpu_custom_call.1} parent=31 // pred_region
          %s276 = sand.u32 %s44, 1
          %s277 = scalar_lea.sflag [#allocation4], %s276
          %s278 = sand.u32 %s44, 1
          %s279 = smul.addr %s278, 64
          %s280 = scalar_lea.vmem [#allocation3], %s279
          %s281 = smul.u32 16, %s27
          %s283 = ssub.s32 1024, 1024
          %284 = vsyncadd %s277, %s283
          %s285 = smul.addr %s281, 2
          %s286 = sadd.s32 %s28, %s285
          %s287 = smul.addr %s286, 64
          %s288 = scalar_lea.hbm %s0, %s287
          %s289 = sshll.u32 %s280, 4
          %s290 = int_to_ptr.vmem [resolvable:$true] %s289
          %295 = dma.hbm_to_vmem [thread:$0]  %s288, 1024, %s290, %s277, 128, 64, 4
        $region36: #{tpu_custom_call.1} parent=31 // pred_fallthru
          _
        // Predicated region
        $region37: #{tpu_custom_call.1} parent=31 // pred_check
          %p296 = pneg %p80
        $region38: #{tpu_custom_call.1} parent=31 // pred_check_branch
          %298 = sbr.rel (%p296) target = $region40
        $region39: #{tpu_custom_call.1} parent=31 // pred_region
          %s299 = sand.u32 %s20, 1
          %s300 = scalar_lea.sflag [#allocation7], %s299
          %s301 = sand.u32 %s70, 1
          %s302 = smul.addr %s301, 64
          %s303 = scalar_lea.vmem [#allocation6], %s302
          %s304 = smul.u32 16, %s28
          %s306 = ssub.s32 1024, 1024
          %307 = vsyncadd %s300, %s306
          %s308 = smul.addr %s304, 64
          %s309 = scalar_lea.hbm %s1, %s308
          %s310 = sshll.u32 %s303, 4
          %s311 = int_to_ptr.vmem [resolvable:$true] %s310
          %316 = dma.hbm_to_vmem [thread:$0]  %s309, 1024, %s311, %s300, 64, 64, 4
        $region40: #{tpu_custom_call.1} parent=31 // pred_fallthru
          _
      $region32: #{tpu_custom_call.1} parent=5 // pred_fallthru
        _
      %p317 = scmp.le.s32.totalorder 1, %s20
      %p318 = scmp.lt.s32.totalorder %s20, 3
      %p319 = pnand %p317, %p318
      %p320 = pneg %p319
      // Predicated region
      $region41: #{tpu_custom_call.1} parent=5 // pred_check
        _
      $region42: #{tpu_custom_call.1} parent=5 // pred_check_branch
        %322 = sbr.rel (%p319) target = $region44
      $region43: #{tpu_custom_call.1} parent=5 // pred_region
        %s323 = ssub.s32 %s20, 1
        %s324 = sand.u32 %s47, 1
        %s325 = scalar_lea.sflag [#allocation4], %s324
        %s326 = sand.u32 %s47, 1
        %s327 = smul.addr %s326, 64
        %s328 = scalar_lea.vmem [#allocation3], %s327
        // Predicated region
        $region45: #{tpu_custom_call.1} parent=43 // pred_check
          %p329 = pneg %p60
        $region46: #{tpu_custom_call.1} parent=43 // pred_check_branch
          %331 = sbr.rel (%p329) target = $region48
        $region47: #{tpu_custom_call.1} parent=43 // pred_region
          %332 = dma.done %s325, 1024
        $region48: #{tpu_custom_call.1} parent=43 // pred_fallthru
          _
        %s333 = sand.u32 %s25, 1
        %s334 = scalar_lea.sflag [#allocation7], %s333
        %s335 = sand.u32 %s73, 1
        %s336 = smul.addr %s335, 64
        %s337 = scalar_lea.vmem [#allocation6], %s336
        // Predicated region
        $region49: #{tpu_custom_call.1} parent=43 // pred_check
          %p338 = pneg %p86
        $region50: #{tpu_custom_call.1} parent=43 // pred_check_branch
          %340 = sbr.rel (%p338) target = $region52
        $region51: #{tpu_custom_call.1} parent=43 // pred_region
          %341 = dma.done %s334, 1024
        $region52: #{tpu_custom_call.1} parent=43 // pred_fallthru
          _
        // Predicated region
        $region53: #{tpu_custom_call.1} parent=43 // pred_check
          %p342 = pneg %p112
        $region54: #{tpu_custom_call.1} parent=43 // pred_check_branch
          %344 = sbr.rel (%p342) target = $region56
        $region55: #{tpu_custom_call.1} parent=43 // pred_region
          %345 = dma.done [#allocation7], 1024
        $region56: #{tpu_custom_call.1} parent=43 // pred_fallthru
          _
        // Predicated region
        $region57: #{tpu_custom_call.1} parent=43 // pred_check
          %p346 = pneg %p133
        $region58: #{tpu_custom_call.1} parent=43 // pred_check_branch
          %348 = sbr.rel (%p346) target = $region60
        $region59: #{tpu_custom_call.1} parent=43 // pred_region
          %349 = dma.done [#allocation10], 2048
        $region60: #{tpu_custom_call.1} parent=43 // pred_fallthru
          _
        // Predicated region
        $region61: #{tpu_custom_call.1} parent=43 // pred_check
          %p350 = pneg %p180
        $region62: #{tpu_custom_call.1} parent=43 // pred_check_branch
          %352 = sbr.rel (%p350) target = $region64
        $region63: #{tpu_custom_call.1} parent=43 // pred_region
          %353 = dma.done [#allocation10], 2048
        $region64: #{tpu_custom_call.1} parent=43 // pred_fallthru
          _
        %s354 = sand.u32 %s47, 1
        %s355 = scalar_lea.sflag [#allocation4], %s354
        %s356 = sand.u32 %s47, 1
        %s357 = smul.addr %s356, 64
        %s358 = scalar_lea.vmem [#allocation3], %s357
        %p359 = pneg %p60
        %p360 = pneg %p57
        %s361 = sand.u32 %s25, 1
        %s362 = scalar_lea.sflag [#allocation7], %s361
        %s363 = sand.u32 %s73, 1
        %s364 = smul.addr %s363, 64
        %s365 = scalar_lea.vmem [#allocation6], %s364
        %p366 = pneg %p86
        %p367 = pneg %p83
        %p368 = pneg %p112
        %p369 = pneg %p109
        %p370 = pneg %p133
        %p371 = pneg %p130
        %p372 = pneg %p154
        %p373 = pneg %p151
        %p374 = pneg %p180
        %p375 = pneg %p177
        %p376 = pneg %p206
        %p377 = pneg %p203
        %s378 = smul.u32 16, %s29
        %s379 = smul.u32 16, %s30
        %s380 = smul.u32 16, %s29
        %s381 = smul.u32 16, %s29
        %s382 = smul.u32 16, %s29
        %p384 = scmp.eq.s32.totalorder %s30, 0
        // Predicated region
        $region65: #{tpu_custom_call.1} parent=43 // pred_check
          %p385 = pneg %p384
        $region66: #{tpu_custom_call.1} parent=43 // pred_check_branch
          %387 = sbr.rel (%p385) target = $region68
        $region67: #{tpu_custom_call.1} parent=43 // pred_region
          %388 = vst [vmem:[#allocation2] sm:$0xff] 0.0
          %389 = vst [vmem:[#allocation2 + $0x8] sm:$0xff] 0.0
          %390 = vst [vmem:[#allocation2 + $0x10] sm:$0xff] 0.0
          %391 = vst [vmem:[#allocation2 + $0x18] sm:$0xff] 0.0
          %392 = vst [vmem:[#allocation2 + $0x20] sm:$0xff] 0.0
          %393 = vst [vmem:[#allocation2 + $0x28] sm:$0xff] 0.0
          %394 = vst [vmem:[#allocation2 + $0x30] sm:$0xff] 0.0
          %395 = vst [vmem:[#allocation2 + $0x38] sm:$0xff] 0.0
          %396 = vst [vmem:[#allocation2 + $0x40] sm:$0xff] 0.0
          %397 = vst [vmem:[#allocation2 + $0x48] sm:$0xff] 0.0
          %398 = vst [vmem:[#allocation2 + $0x50] sm:$0xff] 0.0
          %399 = vst [vmem:[#allocation2 + $0x58] sm:$0xff] 0.0
          %400 = vst [vmem:[#allocation2 + $0x60] sm:$0xff] 0.0
          %401 = vst [vmem:[#allocation2 + $0x68] sm:$0xff] 0.0
          %402 = vst [vmem:[#allocation2 + $0x70] sm:$0xff] 0.0
          %403 = vst [vmem:[#allocation2 + $0x78] sm:$0xff] 0.0
        $region68: #{tpu_custom_call.1} parent=43 // pred_fallthru
          _
        %v404 = vld [vmem:[#allocation2] sm:$0xff]
        %v405 = vld [vmem:[#allocation2 + $0x8] sm:$0xff]
        %v406 = vld [vmem:[#allocation2 + $0x10] sm:$0xff]
        %v407 = vld [vmem:[#allocation2 + $0x18] sm:$0xff]
        %v408 = vld [vmem:[#allocation2 + $0x20] sm:$0xff]
        %v409 = vld [vmem:[#allocation2 + $0x28] sm:$0xff]
        %v410 = vld [vmem:[#allocation2 + $0x30] sm:$0xff]
        %v411 = vld [vmem:[#allocation2 + $0x38] sm:$0xff]
        %v412 = vld [vmem:[#allocation2 + $0x40] sm:$0xff]
        %v413 = vld [vmem:[#allocation2 + $0x48] sm:$0xff]
        %v414 = vld [vmem:[#allocation2 + $0x50] sm:$0xff]
        %v415 = vld [vmem:[#allocation2 + $0x58] sm:$0xff]
        %v416 = vld [vmem:[#allocation2 + $0x60] sm:$0xff]
        %v417 = vld [vmem:[#allocation2 + $0x68] sm:$0xff]
        %v418 = vld [vmem:[#allocation2 + $0x70] sm:$0xff]
        %v419 = vld [vmem:[#allocation2 + $0x78] sm:$0xff]
        %v420 = vld [vmem:[%s328] sm:$0xf]
        %v421 = vld [vmem:[%s328 + $0x4] sm:$0xf]
        %v422 = vld [vmem:[%s328 + $0x8] sm:$0xf]
        %v423 = vld [vmem:[%s328 + $0xc] sm:$0xf]
        %v424 = vld [vmem:[%s328 + $0x10] sm:$0xf]
        %v425 = vld [vmem:[%s328 + $0x14] sm:$0xf]
        %v426 = vld [vmem:[%s328 + $0x18] sm:$0xf]
        %v427 = vld [vmem:[%s328 + $0x1c] sm:$0xf]
        %v428 = vld [vmem:[%s328 + $0x20] sm:$0xf]
        %v429 = vld [vmem:[%s328 + $0x24] sm:$0xf]
        %v430 = vld [vmem:[%s328 + $0x28] sm:$0xf]
        %v431 = vld [vmem:[%s328 + $0x2c] sm:$0xf]
        %v432 = vld [vmem:[%s328 + $0x30] sm:$0xf]
        %v433 = vld [vmem:[%s328 + $0x34] sm:$0xf]
        %v434 = vld [vmem:[%s328 + $0x38] sm:$0xf]
        %v435 = vld [vmem:[%s328 + $0x3c] sm:$0xf]
        %v436 = vld [vmem:[%s337] sm:$0xf]
        %v437 = vld [vmem:[%s337 + $0x4] sm:$0xf]
        %v438 = vld [vmem:[%s337 + $0x8] sm:$0xf]
        %v439 = vld [vmem:[%s337 + $0xc] sm:$0xf]
        %v440 = vld [vmem:[%s337 + $0x10] sm:$0xf]
        %v441 = vld [vmem:[%s337 + $0x14] sm:$0xf]
        %v442 = vld [vmem:[%s337 + $0x18] sm:$0xf]
        %v443 = vld [vmem:[%s337 + $0x1c] sm:$0xf]
        %v444 = vld [vmem:[%s337 + $0x20] sm:$0xf]
        %v445 = vld [vmem:[%s337 + $0x24] sm:$0xf]
        %v446 = vld [vmem:[%s337 + $0x28] sm:$0xf]
        %v447 = vld [vmem:[%s337 + $0x2c] sm:$0xf]
        %v448 = vld [vmem:[%s337 + $0x30] sm:$0xf]
        %v449 = vld [vmem:[%s337 + $0x34] sm:$0xf]
        %v450 = vld [vmem:[%s337 + $0x38] sm:$0xf]
        %v451 = vld [vmem:[%s337 + $0x3c] sm:$0xf]
        %v468 = vunpack.c.l.b16 %v420
        %v469 = vunpack.c.l.b16 %v421
        %v470 = vunpack.c.l.b16 %v422
        %v471 = vunpack.c.l.b16 %v423
        %v472 = vunpack.c.l.b16 %v424
        %v473 = vunpack.c.l.b16 %v425
        %v474 = vunpack.c.l.b16 %v426
        %v475 = vunpack.c.l.b16 %v427
        %v476 = vunpack.c.l.b16 %v428
        %v477 = vunpack.c.l.b16 %v429
        %v478 = vunpack.c.l.b16 %v430
        %v479 = vunpack.c.l.b16 %v431
        %v480 = vunpack.c.l.b16 %v432
        %v481 = vunpack.c.l.b16 %v433
        %v482 = vunpack.c.l.b16 %v434
        %v483 = vunpack.c.l.b16 %v435
        %v484 = vpack.c.b16 %v469, %v468
        %v485 = vpack.c.b16 %v471, %v470
        %v486 = vpack.c.b16 %v473, %v472
        %v487 = vpack.c.b16 %v475, %v474
        %v488 = vpack.c.b16 %v477, %v476
        %v489 = vpack.c.b16 %v479, %v478
        %v490 = vpack.c.b16 %v481, %v480
        %v491 = vpack.c.b16 %v483, %v482
        %v516 = vunpack.c.l.b16 %v436
        %v517 = vunpack.c.l.b16 %v437
        %v518 = vunpack.c.l.b16 %v438
        %v519 = vunpack.c.l.b16 %v439
        %v520 = vunpack.c.l.b16 %v440
        %v521 = vunpack.c.l.b16 %v441
        %v522 = vunpack.c.l.b16 %v442
        %v523 = vunpack.c.l.b16 %v443
        %v524 = vunpack.c.l.b16 %v444
        %v525 = vunpack.c.l.b16 %v445
        %v526 = vunpack.c.l.b16 %v446
        %v527 = vunpack.c.l.b16 %v447
        %v528 = vunpack.c.l.b16 %v448
        %v529 = vunpack.c.l.b16 %v449
        %v530 = vunpack.c.l.b16 %v450
        %v531 = vunpack.c.l.b16 %v451
        %v532 = vpack.c.b16 %v517, %v516
        %v533 = vpack.c.b16 %v519, %v518
        %v534 = vpack.c.b16 %v521, %v520
        %v535 = vpack.c.b16 %v523, %v522
        %v536 = vpack.c.b16 %v525, %v524
        %v537 = vpack.c.b16 %v527, %v526
        %v538 = vpack.c.b16 %v529, %v528
        %v539 = vpack.c.b16 %v531, %v530
        %548 = vmatprep.subr.bf16.mxu0 0
        %549 = vmatpush1.bf16.msra.mxu0 %v532
        %550 = vmatprep.subr.bf16.mxu0 0
        %551 = vmatpush1.bf16.msra.mxu0 %v533
        %552 = vmatprep.subr.bf16.mxu0 0
        %553 = vmatpush1.bf16.msra.mxu0 %v534
        %554 = vmatprep.subr.bf16.mxu0 0
        %555 = vmatpush1.bf16.msra.mxu0 %v535
        %556 = vmatprep.subr.bf16.mxu0 0
        %557 = vmatpush1.bf16.msra.mxu0 %v536
        %558 = vmatprep.subr.bf16.mxu0 0
        %559 = vmatpush1.bf16.msra.mxu0 %v537
        %560 = vmatprep.subr.bf16.mxu0 0
        %561 = vmatpush1.bf16.msra.mxu0 %v538
        %562 = vmatprep.subr.bf16.mxu0 0
        %563 = vmatpush1.bf16.msra.mxu0 %v539
        %564 = vmatprep.subr.bf16.mxu0 0
        %565 = vmatpush1.bf16.msra.mxu0 0
        %566 = vmatprep.subr.bf16.mxu0 0
        %567 = vmatpush1.bf16.msra.mxu0 0
        %568 = vmatprep.subr.bf16.mxu0 0
        %569 = vmatpush1.bf16.msra.mxu0 0
        %570 = vmatprep.subr.bf16.mxu0 0
        %571 = vmatpush1.bf16.msra.mxu0 0
        %572 = vmatprep.subr.bf16.mxu0 0
        %573 = vmatpush1.bf16.msra.mxu0 0
        %574 = vmatprep.subr.bf16.mxu0 0
        %575 = vmatpush1.bf16.msra.mxu0 0
        %576 = vmatprep.subr.bf16.mxu0 0
        %577 = vmatpush1.bf16.msra.mxu0 0
        %578 = vmatprep.subr.bf16.mxu0 0
        %579 = vmatpush1.bf16.msra.mxu0 0
        %580 = vmatprep.mubr.bf16.mxu0 0
        %581 = vmatmul.mubr.bf16.gmra.mrb[0].mxu0 %v484
        %v582 = vpop.f32.mrb[0].mxu0
        %v583 = vadd.f32 0.0, %v582
        %v584 = vpop.f32.mrb[0].mxu0
        %v585 = vpop.f32.mrb[0].mxu0
        %v586 = vadd.f32 0.0, %v585
        %v587 = vpop.f32.mrb[0].mxu0
        %588 = vmatprep.mubr.bf16.mxu0 0
        %589 = vmatmul.mubr.bf16.gmra.mrb[0].mxu0 %v485
        %v590 = vpop.f32.mrb[0].mxu0
        %v591 = vadd.f32 0.0, %v590
        %v592 = vpop.f32.mrb[0].mxu0
        %v593 = vpop.f32.mrb[0].mxu0
        %v594 = vadd.f32 0.0, %v593
        %v595 = vpop.f32.mrb[0].mxu0
        %596 = vmatprep.mubr.bf16.mxu0 0
        %597 = vmatmul.mubr.bf16.gmra.mrb[0].mxu0 %v486
        %v598 = vpop.f32.mrb[0].mxu0
        %v599 = vadd.f32 0.0, %v598
        %v600 = vpop.f32.mrb[0].mxu0
        %v601 = vpop.f32.mrb[0].mxu0
        %v602 = vadd.f32 0.0, %v601
        %v603 = vpop.f32.mrb[0].mxu0
        %604 = vmatprep.mubr.bf16.mxu0 0
        %605 = vmatmul.mubr.bf16.gmra.mrb[0].mxu0 %v487
        %v606 = vpop.f32.mrb[0].mxu0
        %v607 = vadd.f32 0.0, %v606
        %v608 = vpop.f32.mrb[0].mxu0
        %v609 = vpop.f32.mrb[0].mxu0
        %v610 = vadd.f32 0.0, %v609
        %v611 = vpop.f32.mrb[0].mxu0
        %612 = vmatprep.mubr.bf16.mxu0 0
        %613 = vmatmul.mubr.bf16.gmra.mrb[0].mxu0 %v488
        %v614 = vpop.f32.mrb[0].mxu0
        %v615 = vadd.f32 0.0, %v614
        %v616 = vpop.f32.mrb[0].mxu0
        %v617 = vpop.f32.mrb[0].mxu0
        %v618 = vadd.f32 0.0, %v617
        %v619 = vpop.f32.mrb[0].mxu0
        %620 = vmatprep.mubr.bf16.mxu0 0
        %621 = vmatmul.mubr.bf16.gmra.mrb[0].mxu0 %v489
        %v622 = vpop.f32.mrb[0].mxu0
        %v623 = vadd.f32 0.0, %v622
        %v624 = vpop.f32.mrb[0].mxu0
        %v625 = vpop.f32.mrb[0].mxu0
        %v626 = vadd.f32 0.0, %v625
        %v627 = vpop.f32.mrb[0].mxu0
        %628 = vmatprep.mubr.bf16.mxu0 0
        %629 = vmatmul.mubr.bf16.gmra.mrb[0].mxu0 %v490
        %v630 = vpop.f32.mrb[0].mxu0
        %v631 = vadd.f32 0.0, %v630
        %v632 = vpop.f32.mrb[0].mxu0
        %v633 = vpop.f32.mrb[0].mxu0
        %v634 = vadd.f32 0.0, %v633
        %v635 = vpop.f32.mrb[0].mxu0
        %636 = vmatprep.mubr.bf16.mxu0 0
        %637 = vmatmul.mubr.bf16.gmra.mrb[0].mxu0 %v491
        %v638 = vpop.f32.mrb[0].mxu0
        %v639 = vadd.f32 0.0, %v638
        %v640 = vpop.f32.mrb[0].mxu0
        %v641 = vpop.f32.mrb[0].mxu0
        %v642 = vadd.f32 0.0, %v641
        %v643 = vpop.f32.mrb[0].mxu0
        %644 = vdwg.mxu0
        %v645 = vadd.f32 %v404, %v583
        %v646 = vadd.f32 %v405, %v586
        %v647 = vadd.f32 %v406, %v591
        %v648 = vadd.f32 %v407, %v594
        %v649 = vadd.f32 %v408, %v599
        %v650 = vadd.f32 %v409, %v602
        %v651 = vadd.f32 %v410, %v607
        %v652 = vadd.f32 %v411, %v610
        %v653 = vadd.f32 %v412, %v615
        %v654 = vadd.f32 %v413, %v618
        %v655 = vadd.f32 %v414, %v623
        %v656 = vadd.f32 %v415, %v626
        %v657 = vadd.f32 %v416, %v631
        %v658 = vadd.f32 %v417, %v634
        %v659 = vadd.f32 %v418, %v639
        %v660 = vadd.f32 %v419, %v642
        %661 = vst [vmem:[#allocation2] sm:$0xff] %v645
        %662 = vst [vmem:[#allocation2 + $0x8] sm:$0xff] %v646
        %663 = vst [vmem:[#allocation2 + $0x10] sm:$0xff] %v647
        %664 = vst [vmem:[#allocation2 + $0x18] sm:$0xff] %v648
        %665 = vst [vmem:[#allocation2 + $0x20] sm:$0xff] %v649
        %666 = vst [vmem:[#allocation2 + $0x28] sm:$0xff] %v650
        %667 = vst [vmem:[#allocation2 + $0x30] sm:$0xff] %v651
        %668 = vst [vmem:[#allocation2 + $0x38] sm:$0xff] %v652
        %669 = vst [vmem:[#allocation2 + $0x40] sm:$0xff] %v653
        %670 = vst [vmem:[#allocation2 + $0x48] sm:$0xff] %v654
        %671 = vst [vmem:[#allocation2 + $0x50] sm:$0xff] %v655
        %672 = vst [vmem:[#allocation2 + $0x58] sm:$0xff] %v656
        %673 = vst [vmem:[#allocation2 + $0x60] sm:$0xff] %v657
        %674 = vst [vmem:[#allocation2 + $0x68] sm:$0xff] %v658
        %675 = vst [vmem:[#allocation2 + $0x70] sm:$0xff] %v659
        %676 = vst [vmem:[#allocation2 + $0x78] sm:$0xff] %v660
        %p677 = scmp.eq.s32.totalorder %s30, 1
        // Predicated region
        $region69: #{tpu_custom_call.1} parent=43 // pred_check
          %p678 = pneg %p677
        $region70: #{tpu_custom_call.1} parent=43 // pred_check_branch
          %680 = sbr.rel (%p678) target = $region72
        $region71: #{tpu_custom_call.1} parent=43 // pred_region
          %v681 = vld [vmem:[#allocation2] sm:$0xff]
          %v682 = vld [vmem:[#allocation2 + $0x8] sm:$0xff]
          %v683 = vld [vmem:[#allocation2 + $0x10] sm:$0xff]
          %v684 = vld [vmem:[#allocation2 + $0x18] sm:$0xff]
          %v685 = vld [vmem:[#allocation2 + $0x20] sm:$0xff]
          %v686 = vld [vmem:[#allocation2 + $0x28] sm:$0xff]
          %v687 = vld [vmem:[#allocation2 + $0x30] sm:$0xff]
          %v688 = vld [vmem:[#allocation2 + $0x38] sm:$0xff]
          %v689 = vld [vmem:[#allocation2 + $0x40] sm:$0xff]
          %v690 = vld [vmem:[#allocation2 + $0x48] sm:$0xff]
          %v691 = vld [vmem:[#allocation2 + $0x50] sm:$0xff]
          %v692 = vld [vmem:[#allocation2 + $0x58] sm:$0xff]
          %v693 = vld [vmem:[#allocation2 + $0x60] sm:$0xff]
          %v694 = vld [vmem:[#allocation2 + $0x68] sm:$0xff]
          %v695 = vld [vmem:[#allocation2 + $0x70] sm:$0xff]
          %v696 = vld [vmem:[#allocation2 + $0x78] sm:$0xff]
          %v697 = vpack.c.bf16 %v682, %v681
          %v698 = vpack.c.bf16 %v684, %v683
          %v699 = vpack.c.bf16 %v686, %v685
          %v700 = vpack.c.bf16 %v688, %v687
          %v701 = vpack.c.bf16 %v690, %v689
          %v702 = vpack.c.bf16 %v692, %v691
          %v703 = vpack.c.bf16 %v694, %v693
          %v704 = vpack.c.bf16 %v696, %v695
          %v705 = vld [vmem:[#allocation8] sm:$0xf]
          %v706 = vld [vmem:[#allocation8 + $0x4] sm:$0xf]
          %v707 = vld [vmem:[#allocation8 + $0x8] sm:$0xf]
          %v708 = vld [vmem:[#allocation8 + $0xc] sm:$0xf]
          %v709 = vld [vmem:[#allocation8 + $0x10] sm:$0xf]
          %v710 = vld [vmem:[#allocation8 + $0x14] sm:$0xf]
          %v711 = vld [vmem:[#allocation8 + $0x18] sm:$0xf]
          %v712 = vld [vmem:[#allocation8 + $0x1c] sm:$0xf]
          %v713 = vld [vmem:[#allocation8 + $0x20] sm:$0xf]
          %v714 = vld [vmem:[#allocation8 + $0x24] sm:$0xf]
          %v715 = vld [vmem:[#allocation8 + $0x28] sm:$0xf]
          %v716 = vld [vmem:[#allocation8 + $0x2c] sm:$0xf]
          %v717 = vld [vmem:[#allocation8 + $0x30] sm:$0xf]
          %v718 = vld [vmem:[#allocation8 + $0x34] sm:$0xf]
          %v719 = vld [vmem:[#allocation8 + $0x38] sm:$0xf]
          %v720 = vld [vmem:[#allocation8 + $0x3c] sm:$0xf]
          %v737 = vunpack.c.l.b16 %v705
          %v738 = vunpack.c.l.b16 %v706
          %v739 = vunpack.c.l.b16 %v707
          %v740 = vunpack.c.l.b16 %v708
          %v741 = vunpack.c.l.b16 %v709
          %v742 = vunpack.c.l.b16 %v710
          %v743 = vunpack.c.l.b16 %v711
          %v744 = vunpack.c.l.b16 %v712
          %v745 = vunpack.c.l.b16 %v713
          %v746 = vunpack.c.l.b16 %v714
          %v747 = vunpack.c.l.b16 %v715
          %v748 = vunpack.c.l.b16 %v716
          %v749 = vunpack.c.l.b16 %v717
          %v750 = vunpack.c.l.b16 %v718
          %v751 = vunpack.c.l.b16 %v719
          %v752 = vunpack.c.l.b16 %v720
          %v753 = vpack.c.b16 %v738, %v737
          %v754 = vpack.c.b16 %v740, %v739
          %v755 = vpack.c.b16 %v742, %v741
          %v756 = vpack.c.b16 %v744, %v743
          %v757 = vpack.c.b16 %v746, %v745
          %v758 = vpack.c.b16 %v748, %v747
          %v759 = vpack.c.b16 %v750, %v749
          %v760 = vpack.c.b16 %v752, %v751
          %v769 = vld [vmem:[#allocation9] sm:$0xf]
          %v770 = vld [vmem:[#allocation9 + $0x4] sm:$0xf]
          %v771 = vld [vmem:[#allocation9 + $0x8] sm:$0xf]
          %v772 = vld [vmem:[#allocation9 + $0xc] sm:$0xf]
          %v773 = vld [vmem:[#allocation9 + $0x10] sm:$0xf]
          %v774 = vld [vmem:[#allocation9 + $0x14] sm:$0xf]
          %v775 = vld [vmem:[#allocation9 + $0x18] sm:$0xf]
          %v776 = vld [vmem:[#allocation9 + $0x1c] sm:$0xf]
          %v777 = vld [vmem:[#allocation9 + $0x20] sm:$0xf]
          %v778 = vld [vmem:[#allocation9 + $0x24] sm:$0xf]
          %v779 = vld [vmem:[#allocation9 + $0x28] sm:$0xf]
          %v780 = vld [vmem:[#allocation9 + $0x2c] sm:$0xf]
          %v781 = vld [vmem:[#allocation9 + $0x30] sm:$0xf]
          %v782 = vld [vmem:[#allocation9 + $0x34] sm:$0xf]
          %v783 = vld [vmem:[#allocation9 + $0x38] sm:$0xf]
          %v784 = vld [vmem:[#allocation9 + $0x3c] sm:$0xf]
          %v785 = vld [vmem:[#allocation9 + $0x40] sm:$0xf]
          %v786 = vld [vmem:[#allocation9 + $0x44] sm:$0xf]
          %v787 = vld [vmem:[#allocation9 + $0x48] sm:$0xf]
          %v788 = vld [vmem:[#allocation9 + $0x4c] sm:$0xf]
          %v789 = vld [vmem:[#allocation9 + $0x50] sm:$0xf]
          %v790 = vld [vmem:[#allocation9 + $0x54] sm:$0xf]
          %v791 = vld [vmem:[#allocation9 + $0x58] sm:$0xf]
          %v792 = vld [vmem:[#allocation9 + $0x5c] sm:$0xf]
          %v793 = vld [vmem:[#allocation9 + $0x60] sm:$0xf]
          %v794 = vld [vmem:[#allocation9 + $0x64] sm:$0xf]
          %v795 = vld [vmem:[#allocation9 + $0x68] sm:$0xf]
          %v796 = vld [vmem:[#allocation9 + $0x6c] sm:$0xf]
          %v797 = vld [vmem:[#allocation9 + $0x70] sm:$0xf]
          %v798 = vld [vmem:[#allocation9 + $0x74] sm:$0xf]
          %v799 = vld [vmem:[#allocation9 + $0x78] sm:$0xf]
          %v800 = vld [vmem:[#allocation9 + $0x7c] sm:$0xf]
          %v801 = vld [vmem:[%s4] sm:$0x1]
          %v803 = vlaneseq
          %v804 = vshrl.u32 %v803, 7
          %v805 = vsub.s32 0, %v804
          %v806 = vrot.slane %v801, %v805
          %v840 = vunpack.c.l.b16 %v769
          %v841 = vunpack.c.l.b16 %v770
          %v842 = vunpack.c.l.b16 %v771
          %v843 = vunpack.c.l.b16 %v772
          %v844 = vunpack.c.l.b16 %v773
          %v845 = vunpack.c.l.b16 %v774
          %v846 = vunpack.c.l.b16 %v775
          %v847 = vunpack.c.l.b16 %v776
          %v848 = vunpack.c.l.b16 %v777
          %v849 = vunpack.c.l.b16 %v778
          %v850 = vunpack.c.l.b16 %v779
          %v851 = vunpack.c.l.b16 %v780
          %v852 = vunpack.c.l.b16 %v781
          %v853 = vunpack.c.l.b16 %v782
          %v854 = vunpack.c.l.b16 %v783
          %v855 = vunpack.c.l.b16 %v784
          %v856 = vunpack.c.l.b16 %v785
          %v857 = vunpack.c.l.b16 %v786
          %v858 = vunpack.c.l.b16 %v787
          %v859 = vunpack.c.l.b16 %v788
          %v860 = vunpack.c.l.b16 %v789
          %v861 = vunpack.c.l.b16 %v790
          %v862 = vunpack.c.l.b16 %v791
          %v863 = vunpack.c.l.b16 %v792
          %v864 = vunpack.c.l.b16 %v793
          %v865 = vunpack.c.l.b16 %v794
          %v866 = vunpack.c.l.b16 %v795
          %v867 = vunpack.c.l.b16 %v796
          %v868 = vunpack.c.l.b16 %v797
          %v869 = vunpack.c.l.b16 %v798
          %v870 = vunpack.c.l.b16 %v799
          %v871 = vunpack.c.l.b16 %v800
          %v872 = vpack.c.b16 %v841, %v840
          %v873 = vpack.c.b16 %v843, %v842
          %v874 = vpack.c.b16 %v845, %v844
          %v875 = vpack.c.b16 %v847, %v846
          %v876 = vpack.c.b16 %v849, %v848
          %v877 = vpack.c.b16 %v851, %v850
          %v878 = vpack.c.b16 %v853, %v852
          %v879 = vpack.c.b16 %v855, %v854
          %v880 = vpack.c.b16 %v857, %v856
          %v881 = vpack.c.b16 %v859, %v858
          %v882 = vpack.c.b16 %v861, %v860
          %v883 = vpack.c.b16 %v863, %v862
          %v884 = vpack.c.b16 %v865, %v864
          %v885 = vpack.c.b16 %v867, %v866
          %v886 = vpack.c.b16 %v869, %v868
          %v887 = vpack.c.b16 %v871, %v870
          %904 = vmatprep.subr.bf16.mxu0 0
          %905 = vmatpush1.bf16.msra.mxu0 %v872
          %906 = vmatprep.subr.bf16.mxu0 0
          %907 = vmatpush1.bf16.msra.mxu0 %v873
          %908 = vmatprep.subr.bf16.mxu0 0
          %909 = vmatpush1.bf16.msra.mxu0 %v874
          %910 = vmatprep.subr.bf16.mxu0 0
          %911 = vmatpush1.bf16.msra.mxu0 %v875
          %912 = vmatprep.subr.bf16.mxu0 0
          %913 = vmatpush1.bf16.msra.mxu0 %v876
          %914 = vmatprep.subr.bf16.mxu0 0
          %915 = vmatpush1.bf16.msra.mxu0 %v877
          %916 = vmatprep.subr.bf16.mxu0 0
          %917 = vmatpush1.bf16.msra.mxu0 %v878
          %918 = vmatprep.subr.bf16.mxu0 0
          %919 = vmatpush1.bf16.msra.mxu0 %v879
          %920 = vmatprep.subr.bf16.mxu0 0
          %921 = vmatpush1.bf16.msra.mxu0 %v880
          %922 = vmatprep.subr.bf16.mxu0 0
          %923 = vmatpush1.bf16.msra.mxu0 %v881
          %924 = vmatprep.subr.bf16.mxu0 0
          %925 = vmatpush1.bf16.msra.mxu0 %v882
          %926 = vmatprep.subr.bf16.mxu0 0
          %927 = vmatpush1.bf16.msra.mxu0 %v883
          %928 = vmatprep.subr.bf16.mxu0 0
          %929 = vmatpush1.bf16.msra.mxu0 %v884
          %930 = vmatprep.subr.bf16.mxu0 0
          %931 = vmatpush1.bf16.msra.mxu0 %v885
          %932 = vmatprep.subr.bf16.mxu0 0
          %933 = vmatpush1.bf16.msra.mxu0 %v886
          %934 = vmatprep.subr.bf16.mxu0 0
          %935 = vmatpush1.bf16.msra.mxu0 %v887
          %936 = vmatprep.mubr.bf16.mxu0 %v697
          %937 = vmatmul.mubr.bf16.gmra.mrb[0].mxu0 %v753
          %v938 = vpop.f32.mrb[0].mxu0
          %v939 = vadd.f32 %v806, %v938
          %v940 = vpop.f32.mrb[0].mxu0
          %v941 = vpop.f32.mrb[0].mxu0
          %v942 = vadd.f32 %v806, %v941
          %v943 = vpop.f32.mrb[0].mxu0
          %944 = vmatprep.mubr.bf16.mxu0 %v698
          %945 = vmatmul.mubr.bf16.gmra.mrb[0].mxu0 %v754
          %v946 = vpop.f32.mrb[0].mxu0
          %v947 = vadd.f32 %v806, %v946
          %v948 = vpop.f32.mrb[0].mxu0
          %v949 = vpop.f32.mrb[0].mxu0
          %v950 = vadd.f32 %v806, %v949
          %v951 = vpop.f32.mrb[0].mxu0
          %952 = vmatprep.mubr.bf16.mxu0 %v699
          %953 = vmatmul.mubr.bf16.gmra.mrb[0].mxu0 %v755
          %v954 = vpop.f32.mrb[0].mxu0
          %v955 = vadd.f32 %v806, %v954
          %v956 = vpop.f32.mrb[0].mxu0
          %v957 = vpop.f32.mrb[0].mxu0
          %v958 = vadd.f32 %v806, %v957
          %v959 = vpop.f32.mrb[0].mxu0
          %960 = vmatprep.mubr.bf16.mxu0 %v700
          %961 = vmatmul.mubr.bf16.gmra.mrb[0].mxu0 %v756
          %v962 = vpop.f32.mrb[0].mxu0
          %v963 = vadd.f32 %v806, %v962
          %v964 = vpop.f32.mrb[0].mxu0
          %v965 = vpop.f32.mrb[0].mxu0
          %v966 = vadd.f32 %v806, %v965
          %v967 = vpop.f32.mrb[0].mxu0
          %968 = vmatprep.mubr.bf16.mxu0 %v701
          %969 = vmatmul.mubr.bf16.gmra.mrb[0].mxu0 %v757
          %v970 = vpop.f32.mrb[0].mxu0
          %v971 = vadd.f32 %v806, %v970
          %v972 = vpop.f32.mrb[0].mxu0
          %v973 = vpop.f32.mrb[0].mxu0
          %v974 = vadd.f32 %v806, %v973
          %v975 = vpop.f32.mrb[0].mxu0
          %976 = vmatprep.mubr.bf16.mxu0 %v702
          %977 = vmatmul.mubr.bf16.gmra.mrb[0].mxu0 %v758
          %v978 = vpop.f32.mrb[0].mxu0
          %v979 = vadd.f32 %v806, %v978
          %v980 = vpop.f32.mrb[0].mxu0
          %v981 = vpop.f32.mrb[0].mxu0
          %v982 = vadd.f32 %v806, %v981
          %v983 = vpop.f32.mrb[0].mxu0
          %984 = vmatprep.mubr.bf16.mxu0 %v703
          %985 = vmatmul.mubr.bf16.gmra.mrb[0].mxu0 %v759
          %v986 = vpop.f32.mrb[0].mxu0
          %v987 = vadd.f32 %v806, %v986
          %v988 = vpop.f32.mrb[0].mxu0
          %v989 = vpop.f32.mrb[0].mxu0
          %v990 = vadd.f32 %v806, %v989
          %v991 = vpop.f32.mrb[0].mxu0
          %992 = vmatprep.mubr.bf16.mxu0 %v704
          %993 = vmatmul.mubr.bf16.gmra.mrb[0].mxu0 %v760
          %v994 = vpop.f32.mrb[0].mxu0
          %v995 = vadd.f32 %v806, %v994
          %v996 = vpop.f32.mrb[0].mxu0
          %v997 = vpop.f32.mrb[0].mxu0
          %v998 = vadd.f32 %v806, %v997
          %v999 = vpop.f32.mrb[0].mxu0
          %1000 = vdwg.mxu0
          %v1001 = vmax.f32 %v939, 0.0
          %v1002 = vmax.f32 %v942, 0.0
          %v1003 = vmax.f32 %v947, 0.0
          %v1004 = vmax.f32 %v950, 0.0
          %v1005 = vmax.f32 %v955, 0.0
          %v1006 = vmax.f32 %v958, 0.0
          %v1007 = vmax.f32 %v963, 0.0
          %v1008 = vmax.f32 %v966, 0.0
          %v1009 = vmax.f32 %v971, 0.0
          %v1010 = vmax.f32 %v974, 0.0
          %v1011 = vmax.f32 %v979, 0.0
          %v1012 = vmax.f32 %v982, 0.0
          %v1013 = vmax.f32 %v987, 0.0
          %v1014 = vmax.f32 %v990, 0.0
          %v1015 = vmax.f32 %v995, 0.0
          %v1016 = vmax.f32 %v998, 0.0
          %v1017 = vld [vmem:[#allocation11] sm:$0xff]
          %v1018 = vld [vmem:[#allocation11 + $0x8] sm:$0xff]
          %v1019 = vld [vmem:[#allocation11 + $0x10] sm:$0xff]
          %v1020 = vld [vmem:[#allocation11 + $0x18] sm:$0xff]
          %v1021 = vld [vmem:[#allocation11 + $0x20] sm:$0xff]
          %v1022 = vld [vmem:[#allocation11 + $0x28] sm:$0xff]
          %v1023 = vld [vmem:[#allocation11 + $0x30] sm:$0xff]
          %v1024 = vld [vmem:[#allocation11 + $0x38] sm:$0xff]
          %v1025 = vld [vmem:[#allocation11 + $0x40] sm:$0xff]
          %v1026 = vld [vmem:[#allocation11 + $0x48] sm:$0xff]
          %v1027 = vld [vmem:[#allocation11 + $0x50] sm:$0xff]
          %v1028 = vld [vmem:[#allocation11 + $0x58] sm:$0xff]
          %v1029 = vld [vmem:[#allocation11 + $0x60] sm:$0xff]
          %v1030 = vld [vmem:[#allocation11 + $0x68] sm:$0xff]
          %v1031 = vld [vmem:[#allocation11 + $0x70] sm:$0xff]
          %v1032 = vld [vmem:[#allocation11 + $0x78] sm:$0xff]
          %v1033 = vmul.f32 %v1001, %v1017
          %v1034 = vmul.f32 %v1002, %v1018
          %v1035 = vmul.f32 %v1003, %v1019
          %v1036 = vmul.f32 %v1004, %v1020
          %v1037 = vmul.f32 %v1005, %v1021
          %v1038 = vmul.f32 %v1006, %v1022
          %v1039 = vmul.f32 %v1007, %v1023
          %v1040 = vmul.f32 %v1008, %v1024
          %v1041 = vmul.f32 %v1009, %v1025
          %v1042 = vmul.f32 %v1010, %v1026
          %v1043 = vmul.f32 %v1011, %v1027
          %v1044 = vmul.f32 %v1012, %v1028
          %v1045 = vmul.f32 %v1013, %v1029
          %v1046 = vmul.f32 %v1014, %v1030
          %v1047 = vmul.f32 %v1015, %v1031
          %v1048 = vmul.f32 %v1016, %v1032
          %1049 = vst [vmem:[#allocation12] sm:$0xff] %v1033
          %1050 = vst [vmem:[#allocation12 + $0x8] sm:$0xff] %v1034
          %1051 = vst [vmem:[#allocation12 + $0x10] sm:$0xff] %v1035
          %1052 = vst [vmem:[#allocation12 + $0x18] sm:$0xff] %v1036
          %1053 = vst [vmem:[#allocation12 + $0x20] sm:$0xff] %v1037
          %1054 = vst [vmem:[#allocation12 + $0x28] sm:$0xff] %v1038
          %1055 = vst [vmem:[#allocation12 + $0x30] sm:$0xff] %v1039
          %1056 = vst [vmem:[#allocation12 + $0x38] sm:$0xff] %v1040
          %1057 = vst [vmem:[#allocation12 + $0x40] sm:$0xff] %v1041
          %1058 = vst [vmem:[#allocation12 + $0x48] sm:$0xff] %v1042
          %1059 = vst [vmem:[#allocation12 + $0x50] sm:$0xff] %v1043
          %1060 = vst [vmem:[#allocation12 + $0x58] sm:$0xff] %v1044
          %1061 = vst [vmem:[#allocation12 + $0x60] sm:$0xff] %v1045
          %1062 = vst [vmem:[#allocation12 + $0x68] sm:$0xff] %v1046
          %1063 = vst [vmem:[#allocation12 + $0x70] sm:$0xff] %v1047
          %1064 = vst [vmem:[#allocation12 + $0x78] sm:$0xff] %v1048
        $region72: #{tpu_custom_call.1} parent=43 // pred_fallthru
          _
        // Predicated region
        $region73: #{tpu_custom_call.1} parent=43 // pred_check
          %p1065 = pneg %p203
        $region74: #{tpu_custom_call.1} parent=43 // pred_check_branch
          %1067 = sbr.rel (%p1065) target = $region76
        $region75: #{tpu_custom_call.1} parent=43 // pred_region
          %s1068 = smul.u32 16, %s29
          %s1070 = ssub.s32 2048, 2048
          %1071 = vsyncadd [#allocation5], %s1070
          %s1072 = smul.addr %s1068, 128
          %s1073 = scalar_lea.hbm %s6, %s1072
          %s1074 = sshll.u32 [#allocation12], 4
          %s1075 = int_to_ptr.vmem [resolvable:$true] %s1074
          %1080 = dma.vmem_to_hbm [thread:$0]  %s1075, 2048, %s1073, [#allocation5], 128, 128, 8
        $region76: #{tpu_custom_call.1} parent=43 // pred_fallthru
          _
        // Predicated region
        $region77: #{tpu_custom_call.1} parent=43 // pred_check
          %p1081 = pneg %p203
        $region78: #{tpu_custom_call.1} parent=43 // pred_check_branch
          %1083 = sbr.rel (%p1081) target = $region80
        $region79: #{tpu_custom_call.1} parent=43 // pred_region
          %1084 = dma.done [#allocation5], 2048
        $region80: #{tpu_custom_call.1} parent=43 // pred_fallthru
          _
      $region44: #{tpu_custom_call.1} parent=5 // pred_fallthru
        _
      %p1085 = scmp.le.s32.totalorder 2, %s20
      // Predicated region
      $region81: #{tpu_custom_call.1} parent=5 // pred_check
        %p1086 = pneg %p1085
      $region82: #{tpu_custom_call.1} parent=5 // pred_check_branch
        %1088 = sbr.rel (%p1086) target = $region84
      $region83: #{tpu_custom_call.1} parent=5 // pred_region
        %s1089 = ssub.s32 %s20, 2
      $region84: #{tpu_custom_call.1} parent=5 // pred_fallthru
        _
    $region6: #{tpu_custom_call.1} parent=1 // loop_footer
      %s24 = sadd.s32 1, %s20
    $region7: #{tpu_custom_call.1} parent=1 // loop_footer_branch
      %19 = sbr.rel target = $region3
    $region8: #{tpu_custom_call.1} parent=1 // loop_exit
      _
    %1090 = vsyncpa [#allocation4], 1
    %s1091 = scalar_lea.sflag [#allocation4], 1
    %1092 = vsyncpa %s1091, 1
    %1093 = vsyncpa [#allocation7], 1
    %s1094 = scalar_lea.sflag [#allocation7], 1
    %1095 = vsyncpa %s1094, 1
    %1096 = vsyncpa [#allocation10], 1
    %1097 = vsyncpa [#allocation5], 1
    %s1098 = scalar_lea.sflag [#allocation5], 1
    %1099 = vsyncpa %s1098, 1

</llo_original>
